<compile_context>
chip_gen: v7x
topology: tpu7x:2x2x1
jax: 0.10.0
libtpu: 0.0.40
codegen_flags: <defaults>
</compile_context>

<pallas_src>
import jax
import jax.numpy as jnp
from jax.experimental import pallas as pl
from jax.experimental.pallas import tpu as pltpu


def _round_up(x: int, m: int) -> int:
    return ((x + m - 1) // m) * m


def _pick_tile(dim_padded: int, cap: int) -> int:
    """Largest multiple of 128 <= cap that divides dim_padded (dim_padded % 128 == 0)."""
    t = min(cap, dim_padded)
    t = max(128, (t // 128) * 128)
    while t > 128 and dim_padded % t:
        t -= 128
    return t


# --------------------------------------------------------------------------
# Kernels
# --------------------------------------------------------------------------
def _linear_single_block_kernel(x_ref, wt_ref, b_ref, o_ref):
    # Whole problem in one VMEM block: x (B,IN), wt (IN,OUT), b (1,OUT).
    o_ref[...] = (
        jnp.dot(x_ref[...], wt_ref[...], preferred_element_type=jnp.float32)
        + b_ref[...]
    ).astype(o_ref.dtype)


def _linear_tiled_kernel(x_ref, wt_ref, b_ref, o_ref):
    # x_ref: (tm, tk), wt_ref: (tk, tn), b_ref: (1, tn), o_ref: (tm, tn) f32.
    # o_ref's block index is constant across k, so it stays VMEM-resident and
    # doubles as the accumulator (no scratch needed for f32 output).
    k = pl.program_id(2)

    @pl.when(k == 0)
    def _init():
        o_ref[...] = jnp.zeros_like(o_ref)

    o_ref[...] += jnp.dot(
        x_ref[...], wt_ref[...], preferred_element_type=jnp.float32
    )

    @pl.when(k == pl.num_programs(2) - 1)
    def _bias():
        o_ref[...] += b_ref[...]   # bias added exactly once, on the f32 sum


# --------------------------------------------------------------------------
# Wrapper
# --------------------------------------------------------------------------
_SMALL_BYTES = 2 << 20  # below this total footprint: single-block kernel


def linear_forward(x, weight, bias, *, tm=512, tn=512, tk=512):
    """out = x @ weight.T + bias (nn.Linear forward) as a Pallas TPU kernel."""
    B, IN = x.shape
    OUT, IN_w = weight.shape
    assert IN_w == IN and bias.shape == (OUT,)

    # nn.Linear stores W as (OUT, IN); feed the MXU (IN, OUT) tiles instead so
    # the contraction needs no in-kernel transpose.  This (and the padding
    # below) is parameter prep: cache it across calls in real inference.
    wt = weight.T                     # (IN, OUT)
    b2d = bias.reshape(1, OUT)

    cost = pl.CostEstimate(
        flops=2 * B * IN * OUT,
        bytes_accessed=4 * (B * IN + IN * OUT + OUT + B * OUT),
        transcendentals=0,
    )

    total_bytes = 4 * (B * IN + IN * OUT + OUT + B * OUT)
    if total_bytes <= _SMALL_BYTES:
        # Tiny problem: full-array blocks (bypasses the (8,128) rule), grid=(),
        # no pad/slice ops, one launch.
        return pl.pallas_call(
            _linear_single_block_kernel,
            out_shape=jax.ShapeDtypeStruct((B, OUT), x.dtype),
            cost_estimate=cost,
        )(x, wt, b2d)

    # ---- Tiled path --------------------------------------------------------
    tm = min(tm, _round_up(B, 8))
    Bp = _round_up(B, tm)
    INp = _round_up(IN, 128)
    OUTp = _round_up(OUT, 128)
    tk = _pick_tile(INp, tk)
    tn = _pick_tile(OUTp, tn)

    # Give the second TensorCore (v7x megacore) work when the M grid collapses
    # to a single block: make sure one parallel axis has >= 2 blocks.
    if Bp // tm == 1 and OUTp // tn == 1 and OUTp >= 256:
        tn = _pick_tile(OUTp, tn // 2)

    # Zero padding keeps the math exact: padded K rows/cols contribute 0 to the
    # dot product, padded OUT columns are sliced away.  Pad only when needed.
    x_p = x if (Bp == B and INp == IN) else jnp.pad(x, ((0, Bp - B), (0, INp - IN)))
    wt_p = wt if (INp == IN and OUTp == OUT) else jnp.pad(
        wt, ((0, INp - IN), (0, OUTp - OUT)))
    b_p = b2d if OUTp == OUT else jnp.pad(b2d, ((0, 0), (0, OUTp - OUT)))

    grid = (Bp // tm, OUTp // tn, INp // tk)   # reduction axis (K) last

    out_p = pl.pallas_call(
        _linear_tiled_kernel,
        out_shape=jax.ShapeDtypeStruct((Bp, OUTp), jnp.float32),
        grid=grid,
        in_specs=[
            pl.BlockSpec((tm, tk), lambda i, j, k: (i, k)),        # x tile
            # Weight streaming dominates at small batch -> deeper buffering.
            pl.BlockSpec((tk, tn), lambda i, j, k: (k, j),
                         pipeline_mode=pl.Buffered(3)),            # W^T tile
            pl.BlockSpec((1, tn), lambda i, j, k: (0, j)),          # bias tile
        ],
        out_specs=pl.BlockSpec((tm, tn), lambda i, j, k: (i, j)),
        compiler_params=pltpu.CompilerParams(
            dimension_semantics=("parallel", "parallel", "arbitrary"),
            vmem_limit_bytes=48 << 20,   # headroom for 512-class tiles; < v7x 64 MiB
        ),
        cost_estimate=cost,
    )(x_p, wt_p, b_p)

    return out_p[:B, :OUT].astype(x.dtype)


if __name__ == "__main__":
    key = jax.random.PRNGKey(0)
    kx, kw, kb, kx2, kw2, kb2 = jax.random.split(key, 6)

    # Small shapes consistent with LinearRegressionTorch(input_size, output_size).
    batch, input_size, output_size = 8, 32, 8
    x = jax.random.normal(kx, (batch, input_size), dtype=jnp.float32)
    bound = 1.0 / (input_size ** 0.5)   # nn.Linear default init range
    weight = jax.random.uniform(
        kw, (output_size, input_size), minval=-bound, maxval=bound, dtype=jnp.float32)
    bias = jax.random.uniform(
        kb, (output_size,), minval=-bound, maxval=bound, dtype=jnp.float32)

    out = linear_forward(x, weight, bias)
    jax.block_until_ready(out)
    ref = jnp.dot(x, weight.T, precision=jax.lax.Precision.HIGHEST) + bias
    assert out.shape == (batch, output_size)
    assert jnp.allclose(out, ref, atol=1e-4, rtol=1e-4)

    # Also exercise the tiled (grid) path once with a medium, unaligned shape.
    B2, IN2, OUT2 = 256, 640, 384
    x2 = jax.random.normal(kx2, (B2, IN2), dtype=jnp.float32)
    w2 = jax.random.normal(kw2, (OUT2, IN2), dtype=jnp.float32) * 0.02
    b2 = jax.random.normal(kb2, (OUT2,), dtype=jnp.float32)
    out2 = linear_forward(x2, w2, b2)
    jax.block_until_ready(out2)
    ref2 = jnp.dot(x2, w2.T, precision=jax.lax.Precision.HIGHEST) + b2
    assert out2.shape == (B2, OUT2)
    assert jnp.allclose(out2, ref2, atol=1e-3, rtol=1e-3)

    print("KERNEL_OK")
</pallas_src>

<mosaic_0001>
module attributes {stable_mosaic.version = 11 : i64} {
  func.func @_linear_single_block_kernel(%arg0: memref<8x32xf32, #tpu.memory_space<vmem>>, %arg1: memref<32x8xf32, #tpu.memory_space<vmem>>, %arg2: memref<1x8xf32, #tpu.memory_space<vmem>>, %arg3: memref<8x8xf32, #tpu.memory_space<vmem>>) attributes {dimension_semantics = [], scalar_prefetch = 0 : i64, scratch_operands = 0 : i64, tpu.core_type = #tpu.core_type<tc>} {
    %c0 = arith.constant 0 : index
    %c0_0 = arith.constant 0 : index
    %0 = vector.load %arg0[%c0, %c0_0] : memref<8x32xf32, #tpu.memory_space<vmem>>, vector<8x32xf32>
    %c0_1 = arith.constant 0 : index
    %c0_2 = arith.constant 0 : index
    %1 = vector.load %arg1[%c0_1, %c0_2] : memref<32x8xf32, #tpu.memory_space<vmem>>, vector<32x8xf32>
    %cst = arith.constant dense<0.000000e+00> : vector<8x8xf32>
    %2 = tpu.matmul %0, %1, %cst {dimension_numbers = #tpu.dot_dimension_numbers<[1], [0], [0], [1], [0, 0, 1, 1], [], []>} : vector<8x32xf32>, vector<32x8xf32>, vector<8x8xf32> -> vector<8x8xf32>
    %c0_3 = arith.constant 0 : index
    %c0_4 = arith.constant 0 : index
    %3 = vector.load %arg2[%c0_3, %c0_4] : memref<1x8xf32, #tpu.memory_space<vmem>>, vector<1x8xf32>
    %4 = vector.broadcast %3 : vector<1x8xf32> to vector<8x8xf32>
    %5 = arith.addf %2, %4 : vector<8x8xf32>
    %c0_5 = arith.constant 0 : index
    %c0_6 = arith.constant 0 : index
    %6 = vector.load %arg3[%c0_5, %c0_6] : memref<8x8xf32, #tpu.memory_space<vmem>>, vector<8x8xf32>
    tpu.vector_store %arg3[%c0_5, %c0_6], %5 {strides = array<i32>} : memref<8x8xf32, #tpu.memory_space<vmem>>, vector<8x8xf32>,
    return
  }
}

</mosaic_0001>

<llo_original>
// kernel: tpu_custom_call.1
$region0: #{tpu_custom_call.1}
  #allocation0 [shape = 'u32[]', space=smem, size = 0x4, offset = 0x4, fixed_abs, tag = 'smem constant byte address 0x4 - core index']
  #allocation1 [shape = 'u32[144,128]{1,0:T(1,128)}', space=vmem, size = 0x12000, scoped, tag = 'internal scratch']
  %s0 = inlined_call_operand.vmem [shape: f32[8,32], index: 0, kind: input, shape index: {}]
  %s1 = inlined_call_operand.vmem [shape: f32[32,8], index: 1, kind: input, shape index: {}]
  %s2 = inlined_call_operand.vmem [shape: f32[1,8], index: 2, kind: input, shape index: {}]
  %s3 = inlined_call_operand.hbm [shape: f32[8,8], index: 3, kind: output, shape index: {}]
  %s4 = sld [smem:[#allocation0]]
  $region22: #{tpu_custom_call.1} parent=0
    _
  %s6 = ssub.s32 1, %s4
  %s7 = scalar_select 0, %s6, %s4
  $region1: #{tpu_custom_call.1} parent=0
    #allocation2 [shape = 'u8[4096]{0}', space=vmem, size = 0x1000, scoped, tag = 'output window, operand 0, single buffered']
    #allocation3 [shape = 's32[1]{0}', space=sflag, size = 0x4, scoped, tag = 'scoped memory for tpu_custom_call.1']
    %8 = vsyncpa [#allocation3], 0
    // Predicated region
    $region2: #{tpu_custom_call.1} parent=1 // pred_check
      _
    $region3: #{tpu_custom_call.1} parent=1 // pred_check_branch
      %10 = sbr.rel (0) target = $region5
    $region4: #{tpu_custom_call.1} parent=1 // pred_region
      _
    $region5: #{tpu_custom_call.1} parent=1 // pred_fallthru
      _
    // Predicated region
    $region6: #{tpu_custom_call.1} parent=1 // pred_check
      _
    $region7: #{tpu_custom_call.1} parent=1 // pred_check_branch
      %12 = sbr.rel (0) target = $region9
    $region8: #{tpu_custom_call.1} parent=1 // pred_region
      _
    $region9: #{tpu_custom_call.1} parent=1 // pred_fallthru
      _
    // Predicated region
    $region10: #{tpu_custom_call.1} parent=1 // pred_check
      _
    $region11: #{tpu_custom_call.1} parent=1 // pred_check_branch
      %14 = sbr.rel (0) target = $region13
    $region12: #{tpu_custom_call.1} parent=1 // pred_region
      _
    $region13: #{tpu_custom_call.1} parent=1 // pred_fallthru
      _
    %v15 = vld [vmem:[%s0] sm:$0xff]
    %v16 = vld [vmem:[%s1] sm:$0xff]
    %v17 = vld [vmem:[%s1 + $0x8] sm:$0xff]
    %v18 = vld [vmem:[%s1 + $0x10] sm:$0xff]
    %v19 = vld [vmem:[%s1 + $0x18] sm:$0xff]
    %v20 = vld [vmem:[%s2] sm:$0x1]
    %v22 = vlaneseq
    %v23 = vshrl.u32 %v22, 7
    %v24 = vsub.s32 0, %v23
    %v25 = vrot.slane %v20, %v24
    %vm27 = vcmask 261120
    %v29 = vsel %vm27, %v15, 0
    %31 = vmatprep.subr.mxu0 0.0
    %32 = vmatpush1.msra.mxu0 %v16
    %33 = vmatprep.subr.mxu0 0.0
    %34 = vmatpush1.msra.mxu0 %v17
    %35 = vmatprep.subr.mxu0 0.0
    %36 = vmatpush1.msra.mxu0 %v18
    %37 = vmatprep.subr.mxu0 0.0
    %38 = vmatpush1.msra.mxu0 %v19
    %39 = vmatprep.subr.mxu0 0.0
    %40 = vmatpush1.msra.mxu0 0.0
    %41 = vmatprep.subr.mxu0 0.0
    %42 = vmatpush1.msra.mxu0 0.0
    %43 = vmatprep.subr.mxu0 0.0
    %44 = vmatpush1.msra.mxu0 0.0
    %45 = vmatprep.subr.mxu0 0.0
    %46 = vmatpush1.msra.mxu0 0.0
    %47 = vmatprep.subr.mxu0 0.0
    %48 = vmatpush1.msra.mxu0 0.0
    %49 = vmatprep.subr.mxu0 0.0
    %50 = vmatpush1.msra.mxu0 0.0
    %51 = vmatprep.subr.mxu0 0.0
    %52 = vmatpush1.msra.mxu0 0.0
    %53 = vmatprep.subr.mxu0 0.0
    %54 = vmatpush1.msra.mxu0 0.0
    %55 = vmatprep.subr.mxu0 0.0
    %56 = vmatpush1.msra.mxu0 0.0
    %57 = vmatprep.subr.mxu0 0.0
    %58 = vmatpush1.msra.mxu0 0.0
    %59 = vmatprep.subr.mxu0 0.0
    %60 = vmatpush1.msra.mxu0 0.0
    %61 = vmatprep.subr.mxu0 0.0
    %62 = vmatpush1.msra.mxu0 0.0
    %63 = vmatprep.subr.mxu0 0.0
    %64 = vmatpush1.msra.mxu0 0.0
    %65 = vmatprep.subr.mxu0 0.0
    %66 = vmatpush1.msra.mxu0 0.0
    %67 = vmatprep.subr.mxu0 0.0
    %68 = vmatpush1.msra.mxu0 0.0
    %69 = vmatprep.subr.mxu0 0.0
    %70 = vmatpush1.msra.mxu0 0.0
    %71 = vmatprep.subr.mxu0 0.0
    %72 = vmatpush1.msra.mxu0 0.0
    %73 = vmatprep.subr.mxu0 0.0
    %74 = vmatpush1.msra.mxu0 0.0
    %75 = vmatprep.subr.mxu0 0.0
    %76 = vmatpush1.msra.mxu0 0.0
    %77 = vmatprep.subr.mxu0 0.0
    %78 = vmatpush1.msra.mxu0 0.0
    %79 = vmatprep.subr.mxu0 0.0
    %80 = vmatpush1.msra.mxu0 0.0
    %81 = vmatprep.subr.mxu0 0.0
    %82 = vmatpush1.msra.mxu0 0.0
    %83 = vmatprep.subr.mxu0 0.0
    %84 = vmatpush1.msra.mxu0 0.0
    %85 = vmatprep.subr.mxu0 0.0
    %86 = vmatpush1.msra.mxu0 0.0
    %87 = vmatprep.subr.mxu0 0.0
    %88 = vmatpush1.msra.mxu0 0.0
    %89 = vmatprep.subr.mxu0 0.0
    %90 = vmatpush1.msra.mxu0 0.0
    %91 = vmatprep.subr.mxu0 0.0
    %92 = vmatpush1.msra.mxu0 0.0
    %93 = vmatprep.subr.mxu0 0.0
    %94 = vmatpush1.msra.mxu0 0.0
    %95 = vmatprep.mubr.f32.mxu0 0.0
    %96 = vmatmul.mubr.f32.gmra.mrb[0].mxu0 %v29
    %v97 = vpop.f32.mrb[0].mxu0
    %v98 = vadd.f32 %v25, %v97
    %v99 = vpop.f32.mrb[0].mxu0
    %100 = vdwg.mxu0
    %vm101 = vcmask 64512
    %102 = vst.msk [vmem:[#allocation2] sm:$0xff] %vm101, %v98
    // Predicated region
    $region14: #{tpu_custom_call.1} parent=1 // pred_check
      _
    $region15: #{tpu_custom_call.1} parent=1 // pred_check_branch
      %104 = sbr.rel (0) target = $region17
    $region16: #{tpu_custom_call.1} parent=1 // pred_region
      %s106 = ssub.s32 128, 128
      %107 = vsyncadd [#allocation3], %s106
      %s109 = sshll.u32 [#allocation2], 4
      %s110 = int_to_ptr.vmem [resolvable:$true] %s109
      %112 = dma.vmem_to_hbm [thread:$0]  %s110, 128, %s3, [#allocation3]
    $region17: #{tpu_custom_call.1} parent=1 // pred_fallthru
      _
    // Predicated region
    $region18: #{tpu_custom_call.1} parent=1 // pred_check
      _
    $region19: #{tpu_custom_call.1} parent=1 // pred_check_branch
      %114 = sbr.rel (0) target = $region21
    $region20: #{tpu_custom_call.1} parent=1 // pred_region
      %115 = dma.done [#allocation3], 128
    $region21: #{tpu_custom_call.1} parent=1 // pred_fallthru
      _
    %116 = vsyncpa [#allocation3], 1

</llo_original>
